<compile_context>
chip_gen: v6e
topology: v6e:2x2x1
jax: 0.10.0
libtpu: 0.0.40
codegen_flags: <defaults>
</compile_context>

<pallas_src>
import jax
import jax.numpy as jnp
from jax import lax
from jax.experimental import pallas as pl
from jax.experimental.pallas import tpu as pltpu


def _round_up(x, m):
    return ((x + m - 1) // m) * m


def _row_granule(dtype):
    isz = jnp.dtype(dtype).itemsize
    return 32 if isz == 1 else (16 if isz == 2 else 8)


def _vmem_budget():
    """(resident-bytes budget, vmem_limit_bytes) for the current chip generation."""
    phys = 64 << 20                     # conservative default = v7x per-TC VMEM
    try:
        info = pltpu.get_tpu_info()
        phys = int(getattr(info, "vmem_capacity_bytes", phys))
    except Exception:
        pass
    resident = min(phys // 3, 28 << 20)                 # ~21 MiB on v7x, 28 MiB on v5e/v6e
    limit = min((phys * 3) // 4, resident + (24 << 20)) # ~45 MiB on v7x, 52 MiB elsewhere
    return resident, limit


def gen_fgan_loss(d_out, g_out, alpha=1.0, beta=0.0, *,
                  block_rows=None, num_splits=None, d_whole_bytes_limit=8 << 20):
    """Pallas implementation of GenFGANLoss.forward. Returns a scalar float32."""
    alpha = float(alpha)
    beta = float(beta)

    # dim 0 is the batch dim; flattening the remaining dims is exact for all three
    # reductions (BCE mean, per-feature mean over dim 0, whole-tensor Frobenius norm).
    g2 = g_out.reshape(g_out.shape[0], -1)
    rows, cols_g = g2.shape
    n_d = int(d_out.size)
    g_isz = jnp.dtype(g2.dtype).itemsize
    d_isz = jnp.dtype(d_out.dtype).itemsize

    resident_budget, vmem_limit = _vmem_budget()

    # ---- how d is fed ---------------------------------------------------------
    # BCE against a constant target is a whole-tensor mean -> order-invariant, so a
    # narrow d_out can be flattened into a lane-dense (Rd, 128) slab.
    rows_d_dense = _round_up(-(-n_d // 128), 8)
    d_whole = rows_d_dense * 128 * d_isz <= d_whole_bytes_limit

    g_gran = _row_granule(g2.dtype)
    d_gran = _row_granule(d_out.dtype)
    gran = g_gran if d_whole else max(g_gran, d_gran)

    per_row = 2 * cols_g * g_isz                     # double-buffered g tile
    if d_whole:
        cols_d = 128
    else:
        d2 = d_out.reshape(d_out.shape[0], -1)
        assert d2.shape[0] == rows, "d_out and g_out must share the batch dim"
        cols_d = d2.shape[1]
        per_row += 2 * cols_d * d_isz                # double-buffered d tile

    r_chunk = g_gran                                  # inner row-chunk for g
    d_chunk = d_gran                                  # inner row-chunk for d

    # Constant-size resident buffers (accumulator/output blocks, whole-d slab).
    const_bytes = 2 * r_chunk * cols_g * 4 + d_chunk * max(cols_d, 128) * 4
    if d_whole:
        const_bytes += 2 * rows_d_dense * 128 * d_isz

    if block_rows is None:
        avail = max(resident_budget - const_bytes, gran * per_row)
        t = (avail // per_row) // gran * gran
        t = int(max(gran, min(t, 1024, _round_up(rows, gran))))
    else:
        t = int(block_rows)
        assert t % gran == 0, f"block_rows must be a multiple of {gran} for this dtype"

    n_split = int(num_splits) if num_splits is not None else (2 if rows >= 2 * t else 1)
    rows_pad = _round_up(rows, t * n_split)
    ni = rows_pad // (t * n_split)                    # row-tiles per split

    # Row padding: zeros for g are exact (contribute 0 to both running sums).
    if rows_pad != rows:
        g2 = jnp.pad(g2, ((0, rows_pad - rows), (0, 0)))

    if d_whole:
        rows_d = _round_up(rows_d_dense, d_chunk * n_split)
        rd_ps = rows_d // n_split
        d_flat = d_out.reshape(-1)
        pad = rows_d * 128 - n_d
        if pad:
            d_flat = jnp.concatenate([d_flat, jnp.full((pad,), 0.5, d_flat.dtype)])
        d_in = d_flat.reshape(rows_d, 128)
        d_spec = pl.BlockSpec((rd_ps, 128), lambda c, i: (c, 0))   # resident per split
        d_has_pad = pad > 0
    else:
        rd_ps = None
        if rows_pad != rows:
            d2 = jnp.pad(d2, ((0, rows_pad - rows), (0, 0)), constant_values=0.5)
        d_in = d2
        d_spec = pl.BlockSpec((t, cols_d), lambda c, i: (c * ni + i, 0))
        d_has_pad = rows_pad != rows

    g_spec = pl.BlockSpec((t, cols_g), lambda c, i: (c * ni + i, 0))

    # Column chunking keeps the register-carried accumulators within vreg budget.
    max_lanes = 8192 // r_chunk
    if cols_g <= max_lanes + 512:
        col_chunks = [(0, cols_g)]
    else:
        col_chunks = [(s, min(s + max_lanes, cols_g)) for s in range(0, cols_g, max_lanes)]

    def bce_of(x):
        # Trace-time alpha specialization drops dead EUP work for alpha in {0, 1}.
        if alpha == 1.0:
            return -jnp.maximum(jnp.log(x), -100.0)
        if alpha == 0.0:
            return -jnp.maximum(jnp.log(1.0 - x), -100.0)
        return -(alpha * jnp.maximum(jnp.log(x), -100.0)
                 + (1.0 - alpha) * jnp.maximum(jnp.log(1.0 - x), -100.0))

    def kernel(d_ref, g_ref, bce_ref, gsum_ref, gsq_ref):
        c = pl.program_id(0)      # split (TensorCore) index
        i = pl.program_id(1)      # row-tile index within the split

        @pl.when(i == 0)
        def _init():
            gsum_ref[...] = jnp.zeros_like(gsum_ref)
            gsq_ref[...] = jnp.zeros_like(gsq_ref)
            if d_whole:
                # Whole lane-dense d slab for this split: BCE computed once; padding
                # masked exactly with a flat-index iota.
                def dbody(k, acc):
                    off = pl.multiple_of(k * d_chunk, d_chunk)
                    dv = d_ref[pl.ds(off, d_chunk), :].astype(jnp.float32)
                    v = bce_of(dv)
                    if d_has_pad:
                        rid = (c * rd_ps + off) + lax.broadcasted_iota(
                            jnp.int32, (d_chunk, 128), 0)
                        lid = lax.broadcasted_iota(jnp.int32, (d_chunk, 128), 1)
                        v = jnp.where(rid * 128 + lid < n_d, v, 0.0)
                    return acc + v

                bce_ref[...] = lax.fori_loop(
                    0, rd_ps // d_chunk, dbody,
                    jnp.zeros((d_chunk, 128), jnp.float32))
            else:
                bce_ref[...] = jnp.zeros_like(bce_ref)

        # ---- g stream: per-chunk loads with register-carried partial sums; one small
        # VMEM RMW of the output-resident accumulator per (column chunk, step).
        for (c0, c1) in col_chunks:
            w = c1 - c0
            full = (c0, c1) == (0, cols_g)

            def gbody(k, carry, c0=c0, w=w, full=full):
                gs, gq = carry
                off = pl.multiple_of(k * r_chunk, r_chunk)
                if full:
                    gv = g_ref[pl.ds(off, r_chunk), :].astype(jnp.float32)
                else:
                    gv = g_ref[pl.ds(off, r_chunk), pl.ds(c0, w)].astype(jnp.float32)
                return gs + gv, gq + gv * gv

            z = jnp.zeros((r_chunk, w), jnp.float32)
            gs, gq = lax.fori_loop(0, t // r_chunk, gbody, (z, z))
            if full:
                gsum_ref[...] += gs
                gsq_ref[...] += gq
            else:
                gsum_ref[:, c0:c1] += gs
                gsq_ref[:, c0:c1] += gq

        # ---- wide-d fallback: stream d tiles alongside g, pad rows masked exactly.
        if not d_whole:
            def dbody(k, acc):
                off = pl.multiple_of(k * d_chunk, d_chunk)
                dv = d_ref[pl.ds(off, d_chunk), :].astype(jnp.float32)
                v = bce_of(dv)
                if d_has_pad:
                    base = (c * ni + i) * t + off
                    rid = base + lax.broadcasted_iota(jnp.int32, (d_chunk, cols_d), 0)
                    v = jnp.where(rid < rows, v, 0.0)
                return acc + v

            bce_ref[...] += lax.fori_loop(
                0, t // d_chunk, dbody, jnp.zeros((d_chunk, cols_d), jnp.float32))

    cols_bce = 128 if d_whole else cols_d
    out_shape = (
        jax.ShapeDtypeStruct((n_split * d_chunk, cols_bce), jnp.float32),   # BCE partials
        jax.ShapeDtypeStruct((n_split * r_chunk, cols_g), jnp.float32),     # sum(g)
        jax.ShapeDtypeStruct((n_split * r_chunk, cols_g), jnp.float32),     # sum(g^2)
    )
    out_specs = [
        pl.BlockSpec((d_chunk, cols_bce), lambda c, i: (c, 0)),
        pl.BlockSpec((r_chunk, cols_g), lambda c, i: (c, 0)),
        pl.BlockSpec((r_chunk, cols_g), lambda c, i: (c, 0)),
    ]

    bce_p, gsum_p, gsq_p = pl.pallas_call(
        kernel,
        out_shape=out_shape,
        grid_spec=pltpu.PrefetchScalarGridSpec(
            num_scalar_prefetch=0,
            grid=(n_split, ni),
            in_specs=[d_spec, g_spec],
            out_specs=out_specs,
        ),
        compiler_params=pltpu.CompilerParams(
            dimension_semantics=("parallel", "arbitrary"),
            vmem_limit_bytes=int(vmem_limit),
        ),
    )(d_in, g2)

    # ---- tiny epilogue: combine per-split partials (a few KB of plain XLA work) ----
    el = jnp.sum(bce_p) * (1.0 / float(n_d))
    col_sum = jnp.sum(gsum_p, axis=0)
    col_sq = jnp.sum(gsq_p, axis=0)
    # TODO(synk): for columns with |mean| >> std a shifted two-pass would be more
    # robust than this per-column one-pass (clamped) form.
    ss = jnp.sum(jnp.maximum(col_sq - col_sum * col_sum * (1.0 / float(rows)), 0.0))
    return el + beta * lax.rsqrt(ss)


def _ref_loss(d_out, g_out, alpha, beta):
    """Pure-JAX replica of the PyTorch GenFGANLoss.forward math."""
    d = d_out.astype(jnp.float32).reshape(-1)
    g = g_out.reshape(g_out.shape[0], -1).astype(jnp.float32)
    log_d = jnp.maximum(jnp.log(d), -100.0)
    log_1md = jnp.maximum(jnp.log(1.0 - d), -100.0)
    el = -jnp.mean(alpha * log_d + (1.0 - alpha) * log_1md)
    mu = jnp.mean(g, axis=0, keepdims=True)
    dl = 1.0 / jnp.sqrt(jnp.sum((g - mu) ** 2))
    return el + beta * dl


if __name__ == "__main__":
    key = jax.random.PRNGKey(0)
    k1, k2, k3, k4, k5, k6 = jax.random.split(key, 6)

    # Case 1: typical GAN shapes — d_out (B,1) probabilities, g_out (B,C,H,W) images.
    d1 = jax.random.uniform(k1, (8, 1), jnp.float32, minval=0.05, maxval=0.95)
    g1 = jax.random.normal(k2, (8, 4, 16, 16), jnp.float32)

    # Case 2: forced small tile + two splits -> exercises init/accumulate/finalize
    # streaming and the per-split partial combine.
    d2 = jax.random.uniform(k3, (32, 1), jnp.float32, minval=0.02, maxval=0.98)
    g2 = jax.random.normal(k4, (32, 4, 8, 8), jnp.float32)

    # Case 3: wide d streamed on the row grid + non-multiple-of-8 batch (row padding
    # and in-kernel masking), general-alpha branch disabled (alpha=0 path).
    d3 = jax.random.uniform(k5, (24, 256), jnp.float32, minval=0.05, maxval=0.95)
    g3 = jax.random.normal(k6, (24, 3, 8, 8), jnp.float32)

    cases = [
        (d1, g1, 1.0, 0.0, {}),
        (d2, g2, 0.7, 0.3, dict(block_rows=8, num_splits=2)),
        (d3, g3, 0.0, 0.5, dict(block_rows=8, num_splits=2, d_whole_bytes_limit=0)),
    ]
    ok = True
    for (d, g, a, b, kw) in cases:
        out = gen_fgan_loss(d, g, alpha=a, beta=b, **kw)
        jax.block_until_ready(out)
        ref = _ref_loss(d, g, a, b)
        if not jnp.allclose(out, ref, rtol=3e-4, atol=3e-5):
            ok = False
            print("MISMATCH", a, b, float(out), float(ref))
    if ok:
        print("KERNEL_OK")
</pallas_src>

<mosaic_0001>
module attributes {stable_mosaic.version = 11 : i64} {
  func.func @kernel(%arg0: i32, %arg1: i32, %arg2: memref<8x128xf32, #tpu.memory_space<vmem>>, %arg3: memref<8x1024xf32, #tpu.memory_space<vmem>>, %arg4: memref<8x128xf32, #tpu.memory_space<vmem>>, %arg5: memref<8x1024xf32, #tpu.memory_space<vmem>>, %arg6: memref<8x1024xf32, #tpu.memory_space<vmem>>) attributes {dimension_semantics = [#tpu.dimension_semantics<parallel>, #tpu.dimension_semantics<arbitrary>], iteration_bounds = array<i64: 1, 1>, scalar_prefetch = 0 : i64, scratch_operands = 0 : i64, tpu.core_type = #tpu.core_type<tc>, window_params = [{transform_indices = @transform_0, window_bounds = array<i64: 8, 128>}, {transform_indices = @transform_1, window_bounds = array<i64: 8, 1024>}, {transform_indices = @transform_2, window_bounds = array<i64: 8, 128>}, {transform_indices = @transform_3, window_bounds = array<i64: 8, 1024>}, {transform_indices = @transform_4, window_bounds = array<i64: 8, 1024>}]} {
    %c0_i32 = arith.constant 0 : i32
    %0 = arith.cmpi eq, %arg1, %c0_i32 : i32
    %1 = arith.extui %0 : i1 to i32
    %c0_i32_0 = arith.constant 0 : i32
    %2 = arith.cmpi ne, %1, %c0_i32_0 : i32
    scf.if %2 {
      %cst_10 = arith.constant 0.000000e+00 : f32
      %17 = vector.broadcast %cst_10 : f32 to vector<8x1024xf32>
      %c0_11 = arith.constant 0 : index
      %c0_12 = arith.constant 0 : index
      %18 = vector.load %arg5[%c0_11, %c0_12] : memref<8x1024xf32, #tpu.memory_space<vmem>>, vector<8x1024xf32>
      tpu.vector_store %arg5[%c0_11, %c0_12], %17 {strides = array<i32>} : memref<8x1024xf32, #tpu.memory_space<vmem>>, vector<8x1024xf32>,
      %cst_13 = arith.constant 0.000000e+00 : f32
      %19 = vector.broadcast %cst_13 : f32 to vector<8x1024xf32>
      %c0_14 = arith.constant 0 : index
      %c0_15 = arith.constant 0 : index
      %20 = vector.load %arg6[%c0_14, %c0_15] : memref<8x1024xf32, #tpu.memory_space<vmem>>, vector<8x1024xf32>
      tpu.vector_store %arg6[%c0_14, %c0_15], %19 {strides = array<i32>} : memref<8x1024xf32, #tpu.memory_space<vmem>>, vector<8x1024xf32>,
      %cst_16 = arith.constant 0.000000e+00 : f32
      %21 = vector.broadcast %cst_16 : f32 to vector<8x128xf32>
      %c0_i32_17 = arith.constant 0 : i32
      %c8_i32_18 = arith.constant 8 : i32
      %22 = arith.muli %c0_i32_17, %c8_i32_18 : i32
      %23 = tpu.assume_multiple %22, 8 : i32
      %24 = arith.index_cast %23 : i32 to index
      %c0_19 = arith.constant 0 : index
      %25 = vector.load %arg2[%24, %c0_19] : memref<8x128xf32, #tpu.memory_space<vmem>>, vector<8x128xf32>
      %26 = math.log %25 : vector<8x128xf32>
      %cst_20 = arith.constant -1.000000e+02 : f32
      %27 = vector.broadcast %cst_20 : f32 to vector<8x128xf32>
      %28 = arith.maximumf %26, %27 : vector<8x128xf32>
      %cst_21 = arith.constant 0.000000e+00 : f32
      %29 = vector.broadcast %cst_21 : f32 to vector<8x128xf32>
      %30 = arith.subf %29, %28 : vector<8x128xf32>
      %c8_i32_22 = arith.constant 8 : i32
      %31 = arith.muli %arg0, %c8_i32_22 : i32
      %32 = arith.addi %31, %23 : i32
      %33 = tpu.iota {dimensions = array<i32: 0>} : vector<8x128xi32>
      %34 = vector.broadcast %32 : i32 to vector<8x128xi32>
      %35 = arith.addi %34, %33 : vector<8x128xi32>
      %36 = tpu.iota {dimensions = array<i32: 1>} : vector<8x128xi32>
      %c128_i32 = arith.constant 128 : i32
      %37 = vector.broadcast %c128_i32 : i32 to vector<8x128xi32>
      %38 = arith.muli %35, %37 : vector<8x128xi32>
      %39 = arith.addi %38, %36 : vector<8x128xi32>
      %c8_i32_23 = arith.constant 8 : i32
      %40 = vector.broadcast %c8_i32_23 : i32 to vector<8x128xi32>
      %41 = arith.cmpi slt, %39, %40 : vector<8x128xi32>
      %cst_24 = arith.constant 0.000000e+00 : f32
      %42 = vector.broadcast %cst_24 : f32 to vector<8x128xf32>
      %43 = arith.select %41, %30, %42 : vector<8x128xi1>, vector<8x128xf32>
      %44 = arith.addf %21, %43 : vector<8x128xf32>
      %c1_i32_25 = arith.constant 1 : i32
      %c0_26 = arith.constant 0 : index
      %c0_27 = arith.constant 0 : index
      %45 = vector.load %arg4[%c0_26, %c0_27] : memref<8x128xf32, #tpu.memory_space<vmem>>, vector<8x128xf32>
      tpu.vector_store %arg4[%c0_26, %c0_27], %44 {strides = array<i32>} : memref<8x128xf32, #tpu.memory_space<vmem>>, vector<8x128xf32>,
    } else {
    }
    %cst = arith.constant 0.000000e+00 : f32
    %3 = vector.broadcast %cst : f32 to vector<8x1024xf32>
    %c0_i32_1 = arith.constant 0 : i32
    %c8_i32 = arith.constant 8 : i32
    %4 = arith.muli %c0_i32_1, %c8_i32 : i32
    %5 = tpu.assume_multiple %4, 8 : i32
    %6 = arith.index_cast %5 : i32 to index
    %c0 = arith.constant 0 : index
    %7 = vector.load %arg3[%6, %c0] : memref<8x1024xf32, #tpu.memory_space<vmem>>, vector<8x1024xf32>
    %8 = arith.addf %3, %7 : vector<8x1024xf32>
    %9 = arith.mulf %7, %7 : vector<8x1024xf32>
    %10 = arith.addf %3, %9 : vector<8x1024xf32>
    %c1_i32 = arith.constant 1 : i32
    %c0_2 = arith.constant 0 : index
    %c0_3 = arith.constant 0 : index
    %11 = vector.load %arg5[%c0_2, %c0_3] : memref<8x1024xf32, #tpu.memory_space<vmem>>, vector<8x1024xf32>
    %12 = arith.addf %11, %8 : vector<8x1024xf32>
    %c0_4 = arith.constant 0 : index
    %c0_5 = arith.constant 0 : index
    %13 = vector.load %arg5[%c0_4, %c0_5] : memref<8x1024xf32, #tpu.memory_space<vmem>>, vector<8x1024xf32>
    tpu.vector_store %arg5[%c0_4, %c0_5], %12 {strides = array<i32>} : memref<8x1024xf32, #tpu.memory_space<vmem>>, vector<8x1024xf32>,
    %c0_6 = arith.constant 0 : index
    %c0_7 = arith.constant 0 : index
    %14 = vector.load %arg6[%c0_6, %c0_7] : memref<8x1024xf32, #tpu.memory_space<vmem>>, vector<8x1024xf32>
    %15 = arith.addf %14, %10 : vector<8x1024xf32>
    %c0_8 = arith.constant 0 : index
    %c0_9 = arith.constant 0 : index
    %16 = vector.load %arg6[%c0_8, %c0_9] : memref<8x1024xf32, #tpu.memory_space<vmem>>, vector<8x1024xf32>
    tpu.vector_store %arg6[%c0_8, %c0_9], %15 {strides = array<i32>} : memref<8x1024xf32, #tpu.memory_space<vmem>>, vector<8x1024xf32>,
    return
  }
  func.func @transform_0(%arg0: i32, %arg1: i32) -> (i32, i32) {
    %c0_i32 = arith.constant 0 : i32
    %c0_i32_0 = arith.constant 0 : i32
    return %arg0, %c0_i32 : i32, i32
  }
  func.func @transform_1(%arg0: i32, %arg1: i32) -> (i32, i32) {
    %c1_i32 = arith.constant 1 : i32
    %0 = arith.muli %arg0, %c1_i32 : i32
    %1 = arith.addi %0, %arg1 : i32
    %c0_i32 = arith.constant 0 : i32
    %c0_i32_0 = arith.constant 0 : i32
    return %1, %c0_i32 : i32, i32
  }
  func.func @transform_2(%arg0: i32, %arg1: i32) -> (i32, i32) {
    %c0_i32 = arith.constant 0 : i32
    %c0_i32_0 = arith.constant 0 : i32
    return %arg0, %c0_i32 : i32, i32
  }
  func.func @transform_3(%arg0: i32, %arg1: i32) -> (i32, i32) {
    %c0_i32 = arith.constant 0 : i32
    %c0_i32_0 = arith.constant 0 : i32
    return %arg0, %c0_i32 : i32, i32
  }
  func.func @transform_4(%arg0: i32, %arg1: i32) -> (i32, i32) {
    %c0_i32 = arith.constant 0 : i32
    %c0_i32_0 = arith.constant 0 : i32
    return %arg0, %c0_i32 : i32, i32
  }
}

</mosaic_0001>

<llo_original>
// kernel: tpu_custom_call.1
$region0: #{tpu_custom_call.1}
  #allocation0 [shape = 'u32[]', space=smem, size = 0x4, offset = 0x4, fixed_abs, tag = 'smem constant byte address 0x4 - core index']
  #allocation1 [shape = 'u32[144,128]{1,0:T(1,128)}', space=vmem, size = 0x12000, scoped, tag = 'internal scratch']
  %s0 = inlined_call_operand.hbm [shape: f32[8,128], index: 0, kind: input, shape index: {}]
  %s1 = inlined_call_operand.hbm [shape: f32[8,1024], index: 1, kind: input, shape index: {}]
  %s2 = inlined_call_operand.hbm [shape: f32[8,128], index: 2, kind: output, shape index: {0}]
  %s3 = inlined_call_operand.hbm [shape: f32[8,1024], index: 3, kind: output, shape index: {1}]
  %s4 = inlined_call_operand.hbm [shape: f32[8,1024], index: 4, kind: output, shape index: {2}]
  %5 = xla_tuple %s2, %s3, %s4
  %s6 = sld [smem:[#allocation0]]
  $region46: #{tpu_custom_call.1} parent=0
    _
  %s8 = ssub.s32 1, %s6
  %s9 = scalar_select 0, %s8, %s6
  $region1: #{tpu_custom_call.1} parent=0
    #allocation2 [shape = 'u8[4096]{0}', space=vmem, size = 0x1000, scoped, tag = 'input window, operand 0, single buffered']
    #allocation3 [shape = 's32[1]{0}', space=sflag, size = 0x4, scoped, tag = 'scoped memory for tpu_custom_call.1']
    #allocation4 [shape = 's32[1]{0}', space=sflag, size = 0x4, scoped, tag = 'scoped memory for tpu_custom_call.1']
    #allocation5 [shape = 'u8[32768]{0}', space=vmem, size = 0x8000, scoped, tag = 'input window, operand 1, single buffered']
    #allocation6 [shape = 's32[1]{0}', space=sflag, size = 0x4, scoped, tag = 'scoped memory for tpu_custom_call.1']
    #allocation7 [shape = 'u8[4096]{0}', space=vmem, size = 0x1000, scoped, tag = 'output window, operand 0, single buffered']
    #allocation8 [shape = 'u8[32768]{0}', space=vmem, size = 0x8000, scoped, tag = 'output window, operand 1, single buffered']
    #allocation9 [shape = 's32[1]{0}', space=sflag, size = 0x4, scoped, tag = 'scoped memory for tpu_custom_call.1']
    #allocation10 [shape = 'u8[32768]{0}', space=vmem, size = 0x8000, scoped, tag = 'output window, operand 2, single buffered']
    %10 = vsyncpa [#allocation3], 0
    %11 = vsyncpa [#allocation6], 0
    %12 = vsyncpa [#allocation4], 0
    %13 = vsyncpa [#allocation9], 0
    // Predicated region
    $region2: #{tpu_custom_call.1} parent=1 // pred_check
      _
    $region3: #{tpu_custom_call.1} parent=1 // pred_check_branch
      %15 = sbr.rel (0) target = $region5
    $region4: #{tpu_custom_call.1} parent=1 // pred_region
      %s17 = ssub.s32 128, 128
      %18 = vsyncadd [#allocation3], %s17
      %s20 = sshll.u32 [#allocation2], 4
      %s21 = int_to_ptr.vmem [resolvable:$true] %s20
      %23 = dma.hbm_to_vmem [thread:$0]  %s0, 128, %s21, [#allocation3]
    $region5: #{tpu_custom_call.1} parent=1 // pred_fallthru
      _
    // Predicated region
    $region6: #{tpu_custom_call.1} parent=1 // pred_check
      _
    $region7: #{tpu_custom_call.1} parent=1 // pred_check_branch
      %25 = sbr.rel (0) target = $region9
    $region8: #{tpu_custom_call.1} parent=1 // pred_region
      %s26 = sadd.s32 0, 0
      %s28 = ssub.s32 1024, 1024
      %29 = vsyncadd [#allocation6], %s28
      %s30 = smul.addr %s26, 8
      %s31 = smul.addr %s30, 128
      %s32 = scalar_lea.hbm %s1, %s31
      %s34 = sshll.u32 [#allocation5], 4
      %s35 = int_to_ptr.vmem [resolvable:$true] %s34
      %37 = dma.hbm_to_vmem [thread:$0]  %s32, 1024, %s35, [#allocation6]
    $region9: #{tpu_custom_call.1} parent=1 // pred_fallthru
      _
    // Predicated region
    $region10: #{tpu_custom_call.1} parent=1 // pred_check
      _
    $region11: #{tpu_custom_call.1} parent=1 // pred_check_branch
      %39 = sbr.rel (0) target = $region13
    $region12: #{tpu_custom_call.1} parent=1 // pred_region
      %40 = dma.done [#allocation3], 128
    $region13: #{tpu_custom_call.1} parent=1 // pred_fallthru
      _
    // Predicated region
    $region14: #{tpu_custom_call.1} parent=1 // pred_check
      _
    $region15: #{tpu_custom_call.1} parent=1 // pred_check_branch
      %42 = sbr.rel (0) target = $region17
    $region16: #{tpu_custom_call.1} parent=1 // pred_region
      %43 = dma.done [#allocation6], 1024
    $region17: #{tpu_custom_call.1} parent=1 // pred_fallthru
      _
    %s44 = sadd.s32 0, 0
    %p45 = scmp.eq.s32.totalorder 0, 0
    // Predicated region
    $region18: #{tpu_custom_call.1} parent=1 // pred_check
      %p46 = pneg %p45
    $region19: #{tpu_custom_call.1} parent=1 // pred_check_branch
      %48 = sbr.rel (%p46) target = $region21
    $region20: #{tpu_custom_call.1} parent=1 // pred_region
      %49 = vst [vmem:[#allocation8] sm:$0xff] 0.0
      %50 = vst [vmem:[#allocation8 + $0x8] sm:$0xff] 0.0
      %51 = vst [vmem:[#allocation8 + $0x10] sm:$0xff] 0.0
      %52 = vst [vmem:[#allocation8 + $0x18] sm:$0xff] 0.0
      %53 = vst [vmem:[#allocation8 + $0x20] sm:$0xff] 0.0
      %54 = vst [vmem:[#allocation8 + $0x28] sm:$0xff] 0.0
      %55 = vst [vmem:[#allocation8 + $0x30] sm:$0xff] 0.0
      %56 = vst [vmem:[#allocation8 + $0x38] sm:$0xff] 0.0
      %57 = vst [vmem:[#allocation10] sm:$0xff] 0.0
      %58 = vst [vmem:[#allocation10 + $0x8] sm:$0xff] 0.0
      %59 = vst [vmem:[#allocation10 + $0x10] sm:$0xff] 0.0
      %60 = vst [vmem:[#allocation10 + $0x18] sm:$0xff] 0.0
      %61 = vst [vmem:[#allocation10 + $0x20] sm:$0xff] 0.0
      %62 = vst [vmem:[#allocation10 + $0x28] sm:$0xff] 0.0
      %63 = vst [vmem:[#allocation10 + $0x30] sm:$0xff] 0.0
      %64 = vst [vmem:[#allocation10 + $0x38] sm:$0xff] 0.0
      %v65 = vld [vmem:[#allocation2] sm:$0xff]
      %v66 = vlog2.pop %v65
      %v67 = vmul.f32 %v66, 0.6931472
      %v68 = vmax.f32 %v67, -100.0
      %v69 = vsub.f32 0.0, %v68
      %s70 = smul.u32 0, 8
      %s71 = sadd.s32 %s70, 0
      %v72 = vlaneseq
      %v73 = vshrl.u32 %v72, 7
      %v74 = vstv %s71
      %v75 = vadd.s32 %v74, %v73
      %v76 = vlaneseq
      %v77 = vand.u32 %v76, 127
      %v78 = vmul.u32 %v75, 128
      %v79 = vadd.s32 %v78, %v77
      %vm80 = vcmp.lt.s32.totalorder %v79, 8
      %v81 = vsel %vm80, %v69, 0.0
      %v82 = vadd.f32 %v81, 0.0
      %83 = vst [vmem:[#allocation7] sm:$0xff] %v82
    $region21: #{tpu_custom_call.1} parent=1 // pred_fallthru
      _
    %s84 = smul.u32 0, 8
    %s85 = smul.addr %s84, 8
    %s86 = scalar_lea.vmem [#allocation5], %s85
    %v87 = vld [vmem:[%s86] sm:$0xff]
    %v88 = vld [vmem:[%s86 + $0x8] sm:$0xff]
    %v89 = vld [vmem:[%s86 + $0x10] sm:$0xff]
    %v90 = vld [vmem:[%s86 + $0x18] sm:$0xff]
    %v91 = vld [vmem:[%s86 + $0x20] sm:$0xff]
    %v92 = vld [vmem:[%s86 + $0x28] sm:$0xff]
    %v93 = vld [vmem:[%s86 + $0x30] sm:$0xff]
    %v94 = vld [vmem:[%s86 + $0x38] sm:$0xff]
    %v95 = vadd.f32 %v87, 0.0
    %v96 = vadd.f32 %v88, 0.0
    %v97 = vadd.f32 %v89, 0.0
    %v98 = vadd.f32 %v90, 0.0
    %v99 = vadd.f32 %v91, 0.0
    %v100 = vadd.f32 %v92, 0.0
    %v101 = vadd.f32 %v93, 0.0
    %v102 = vadd.f32 %v94, 0.0
    %v103 = vmul.f32 %v87, %v87
    %v104 = vmul.f32 %v88, %v88
    %v105 = vmul.f32 %v89, %v89
    %v106 = vmul.f32 %v90, %v90
    %v107 = vmul.f32 %v91, %v91
    %v108 = vmul.f32 %v92, %v92
    %v109 = vmul.f32 %v93, %v93
    %v110 = vmul.f32 %v94, %v94
    %v111 = vadd.f32 %v103, 0.0
    %v112 = vadd.f32 %v104, 0.0
    %v113 = vadd.f32 %v105, 0.0
    %v114 = vadd.f32 %v106, 0.0
    %v115 = vadd.f32 %v107, 0.0
    %v116 = vadd.f32 %v108, 0.0
    %v117 = vadd.f32 %v109, 0.0
    %v118 = vadd.f32 %v110, 0.0
    %v119 = vld [vmem:[#allocation8] sm:$0xff]
    %v120 = vld [vmem:[#allocation8 + $0x8] sm:$0xff]
    %v121 = vld [vmem:[#allocation8 + $0x10] sm:$0xff]
    %v122 = vld [vmem:[#allocation8 + $0x18] sm:$0xff]
    %v123 = vld [vmem:[#allocation8 + $0x20] sm:$0xff]
    %v124 = vld [vmem:[#allocation8 + $0x28] sm:$0xff]
    %v125 = vld [vmem:[#allocation8 + $0x30] sm:$0xff]
    %v126 = vld [vmem:[#allocation8 + $0x38] sm:$0xff]
    %v127 = vadd.f32 %v119, %v95
    %v128 = vadd.f32 %v120, %v96
    %v129 = vadd.f32 %v121, %v97
    %v130 = vadd.f32 %v122, %v98
    %v131 = vadd.f32 %v123, %v99
    %v132 = vadd.f32 %v124, %v100
    %v133 = vadd.f32 %v125, %v101
    %v134 = vadd.f32 %v126, %v102
    %135 = vst [vmem:[#allocation8] sm:$0xff] %v127
    %136 = vst [vmem:[#allocation8 + $0x8] sm:$0xff] %v128
    %137 = vst [vmem:[#allocation8 + $0x10] sm:$0xff] %v129
    %138 = vst [vmem:[#allocation8 + $0x18] sm:$0xff] %v130
    %139 = vst [vmem:[#allocation8 + $0x20] sm:$0xff] %v131
    %140 = vst [vmem:[#allocation8 + $0x28] sm:$0xff] %v132
    %141 = vst [vmem:[#allocation8 + $0x30] sm:$0xff] %v133
    %142 = vst [vmem:[#allocation8 + $0x38] sm:$0xff] %v134
    %v143 = vld [vmem:[#allocation10] sm:$0xff]
    %v144 = vld [vmem:[#allocation10 + $0x8] sm:$0xff]
    %v145 = vld [vmem:[#allocation10 + $0x10] sm:$0xff]
    %v146 = vld [vmem:[#allocation10 + $0x18] sm:$0xff]
    %v147 = vld [vmem:[#allocation10 + $0x20] sm:$0xff]
    %v148 = vld [vmem:[#allocation10 + $0x28] sm:$0xff]
    %v149 = vld [vmem:[#allocation10 + $0x30] sm:$0xff]
    %v150 = vld [vmem:[#allocation10 + $0x38] sm:$0xff]
    %v151 = vadd.f32 %v143, %v111
    %v152 = vadd.f32 %v144, %v112
    %v153 = vadd.f32 %v145, %v113
    %v154 = vadd.f32 %v146, %v114
    %v155 = vadd.f32 %v147, %v115
    %v156 = vadd.f32 %v148, %v116
    %v157 = vadd.f32 %v149, %v117
    %v158 = vadd.f32 %v150, %v118
    %159 = vst [vmem:[#allocation10] sm:$0xff] %v151
    %160 = vst [vmem:[#allocation10 + $0x8] sm:$0xff] %v152
    %161 = vst [vmem:[#allocation10 + $0x10] sm:$0xff] %v153
    %162 = vst [vmem:[#allocation10 + $0x18] sm:$0xff] %v154
    %163 = vst [vmem:[#allocation10 + $0x20] sm:$0xff] %v155
    %164 = vst [vmem:[#allocation10 + $0x28] sm:$0xff] %v156
    %165 = vst [vmem:[#allocation10 + $0x30] sm:$0xff] %v157
    %166 = vst [vmem:[#allocation10 + $0x38] sm:$0xff] %v158
    // Predicated region
    $region22: #{tpu_custom_call.1} parent=1 // pred_check
      _
    $region23: #{tpu_custom_call.1} parent=1 // pred_check_branch
      %168 = sbr.rel (0) target = $region25
    $region24: #{tpu_custom_call.1} parent=1 // pred_region
      %s170 = ssub.s32 128, 128
      %171 = vsyncadd [#allocation4], %s170
      %s173 = sshll.u32 [#allocation7], 4
      %s174 = int_to_ptr.vmem [resolvable:$true] %s173
      %176 = dma.vmem_to_hbm [thread:$0]  %s174, 128, %s2, [#allocation4]
    $region25: #{tpu_custom_call.1} parent=1 // pred_fallthru
      _
    // Predicated region
    $region26: #{tpu_custom_call.1} parent=1 // pred_check
      _
    $region27: #{tpu_custom_call.1} parent=1 // pred_check_branch
      %178 = sbr.rel (0) target = $region29
    $region28: #{tpu_custom_call.1} parent=1 // pred_region
      %s180 = ssub.s32 1024, 1024
      %181 = vsyncadd [#allocation9], %s180
      %s183 = sshll.u32 [#allocation8], 4
      %s184 = int_to_ptr.vmem [resolvable:$true] %s183
      %186 = dma.vmem_to_hbm [thread:$0]  %s184, 1024, %s3, [#allocation9]
    $region29: #{tpu_custom_call.1} parent=1 // pred_fallthru
      _
    // Predicated region
    $region30: #{tpu_custom_call.1} parent=1 // pred_check
      _
    $region31: #{tpu_custom_call.1} parent=1 // pred_check_branch
      %188 = sbr.rel (0) target = $region33
    $region32: #{tpu_custom_call.1} parent=1 // pred_region
      %s190 = ssub.s32 1024, 1024
      %191 = vsyncadd [#allocation9], %s190
      %s193 = sshll.u32 [#allocation10], 4
      %s194 = int_to_ptr.vmem [resolvable:$true] %s193
      %196 = dma.vmem_to_hbm [thread:$0]  %s194, 1024, %s4, [#allocation9]
    $region33: #{tpu_custom_call.1} parent=1 // pred_fallthru
      _
    // Predicated region
    $region34: #{tpu_custom_call.1} parent=1 // pred_check
      _
    $region35: #{tpu_custom_call.1} parent=1 // pred_check_branch
      %198 = sbr.rel (0) target = $region37
    $region36: #{tpu_custom_call.1} parent=1 // pred_region
      %199 = dma.done [#allocation4], 128
    $region37: #{tpu_custom_call.1} parent=1 // pred_fallthru
      _
    // Predicated region
    $region38: #{tpu_custom_call.1} parent=1 // pred_check
      _
    $region39: #{tpu_custom_call.1} parent=1 // pred_check_branch
      %201 = sbr.rel (0) target = $region41
    $region40: #{tpu_custom_call.1} parent=1 // pred_region
      %202 = dma.done [#allocation9], 1024
    $region41: #{tpu_custom_call.1} parent=1 // pred_fallthru
      _
    // Predicated region
    $region42: #{tpu_custom_call.1} parent=1 // pred_check
      _
    $region43: #{tpu_custom_call.1} parent=1 // pred_check_branch
      %204 = sbr.rel (0) target = $region45
    $region44: #{tpu_custom_call.1} parent=1 // pred_region
      %205 = dma.done [#allocation9], 1024
    $region45: #{tpu_custom_call.1} parent=1 // pred_fallthru
      _
    %206 = vsyncpa [#allocation3], 1
    %207 = vsyncpa [#allocation6], 1
    %208 = vsyncpa [#allocation4], 1
    %209 = vsyncpa [#allocation9], 1

</llo_original>
